<compile_context>
chip_gen: v7x
topology: tpu7x:2x2x1
jax: 0.10.0
libtpu: 0.0.40
codegen_flags: <defaults>
</compile_context>

<pallas_src>
import jax
import jax.numpy as jnp
from jax.experimental import pallas as pl
from jax.experimental.pallas import tpu as pltpu

SCALE_FACTOR = 0.18215  # SD first-stage latent scale factor (folded into weights)


def _full_spec(shape):
    """BlockSpec covering the whole (small) 2-D array with a trivial grid=(1,)."""
    return pl.BlockSpec(shape, lambda i: (0, 0))


# ----------------------------------------------------------------------------
# Single fused kernel:
#   tex = sum(((px - py) per-patch @ w_enc_s)^2)          -> out[0, 0]
#   h   = tanh(px @ W1_eff + bias_h)                       (zx never materialized)
#   eps = h @ w2
#   sem = mean((eps - noise)^2)                            -> out[0, 1]
# Everything stays in VMEM/vregs; only a (1,2) SMEM scalar pair leaves the kernel.
# ----------------------------------------------------------------------------
def _fused_forward_kernel(px_ref, dp_ref, wenc_ref, w1e_ref, bh_ref, w2_ref,
                          noise_ref, out_ref):
    # textural loss: nn.MSELoss(reduction='sum')(zx, zy); bias cancels in the diff
    dp = dp_ref[...]                                   # (N*P, Kp) f32
    e = jnp.dot(dp.astype(jnp.bfloat16), wenc_ref[...],
                preferred_element_type=jnp.float32)    # (N*P, Cz)
    out_ref[0, 0] = jnp.sum(e * e)

    # semantic (diffusion) loss on x only (target's semantic loss is discarded
    # by the reference anyway).  c@wc and b_big@w1 are folded into bh_ref.
    px = px_ref[...].astype(jnp.bfloat16)              # (N, P*Kp)
    h = jnp.tanh(
        jnp.dot(px, w1e_ref[...], preferred_element_type=jnp.float32)
        + bh_ref[...]
    )                                                  # (N, H) f32
    eps = jnp.dot(h.astype(jnp.bfloat16), w2_ref[...],
                  preferred_element_type=jnp.float32)  # (N, lat_dim)
    err = eps - noise_ref[...]
    inv_size = 1.0 / float(noise_ref.shape[0] * noise_ref.shape[1])  # static const
    out_ref[0, 1] = jnp.sum(err * err) * inv_size


def fused_forward(px, dp, w_enc, w1_eff, bias_h, w2, noise):
    N, KB = px.shape
    NP, KP = dp.shape
    CZ = w_enc.shape[1]
    H = w1_eff.shape[1]
    L = w2.shape[1]

    flops = 2 * (NP * KP * CZ + N * KB * H + N * H * L)
    bytes_in = int(sum(int(a.size) * a.dtype.itemsize
                       for a in (px, dp, w_enc, w1_eff, bias_h, w2, noise)))
    cost = pl.CostEstimate(flops=int(flops), transcendentals=int(N * H),
                           bytes_accessed=bytes_in + 8)

    out = pl.pallas_call(
        _fused_forward_kernel,
        out_shape=jax.ShapeDtypeStruct((1, 2), jnp.float32),
        grid=(1,),
        in_specs=[
            _full_spec(px.shape),      # px       (N, P*Kp)     f32
            _full_spec(dp.shape),      # px - py  (N*P, Kp)     f32
            _full_spec(w_enc.shape),   # w_enc_s  (Kp, Cz)      bf16
            _full_spec(w1_eff.shape),  # W1_eff   (P*Kp, H)     bf16
            _full_spec(bias_h.shape),  # bias_h   (1, H)        f32
            _full_spec(w2.shape),      # w2       (H, lat_dim)  bf16
            _full_spec(noise.shape),   # noise    (N, lat_dim)  f32
        ],
        out_specs=pl.BlockSpec((1, 2), lambda i: (0, 0),
                               memory_space=pltpu.MemorySpace.SMEM),
        compiler_params=pltpu.CompilerParams(
            dimension_semantics=("arbitrary",)),
        cost_estimate=cost,
    )(px, dp, w_enc, w1_eff, bias_h, w2, noise)
    return out[0, 0], out[0, 1]


# ----------------------------------------------------------------------------
# The target_model stand-in
# ----------------------------------------------------------------------------
class MistTargetModel:
    """Mirrors target_model.forward with a deterministic synthetic SDM."""

    def __init__(self, key, *, img_c=3, img_hw=16, latent_c=4, hidden=32,
                 vocab=32, seq=8, patch=2, mode="mist", rate=10000, g_mode="+",
                 condition="a photo"):
        self.mode = mode
        self.rate = float(rate)
        self.g_mode = g_mode
        self.patch = patch
        ks = jax.random.split(key, 6)
        kp = patch * patch * img_c
        n_patches = (img_hw // patch) ** 2
        lat_dim = latent_c * n_patches
        self.kp = kp
        self.n_patches = n_patches
        self.lat_dim = lat_dim

        # first-stage encoder (patchify conv) weights, SCALE_FACTOR folded in.
        w_enc = jax.random.normal(ks[0], (kp, latent_c), jnp.float32) * 0.2
        b_enc = jax.random.normal(ks[1], (1, latent_c), jnp.float32) * 0.01
        w_enc_s = w_enc * SCALE_FACTOR                      # (Kp, Cz)
        b_enc_s = b_enc * SCALE_FACTOR                      # (1, Cz)

        # "text encoder": embedding table  (learned conditioning stand-in)
        # TODO(synk): real get_learned_conditioning runs a CLIP text transformer;
        # represented here as a deterministic embedding lookup + mean pool.
        self.emb = jax.random.normal(ks[2], (vocab, hidden), jnp.float32) * 0.1
        token_ids = jnp.array([ord(ch) % vocab for ch in condition][:seq], jnp.int32)
        token_ids = jnp.pad(token_ids, (0, seq - token_ids.shape[0]))
        c = jnp.mean(jnp.take(self.emb, token_ids, axis=0), axis=0,
                     keepdims=True)                         # (1, hidden)

        # eps-prediction network (UNet stand-in) weights
        # NOTE: hidden=32 (<128 lanes) wastes MXU columns; fine at this toy size,
        # make hidden a multiple of 128 if the stand-in is allowed to grow.
        w1 = jax.random.normal(ks[3], (lat_dim, hidden), jnp.float32) * 0.05
        wc = jax.random.normal(ks[4], (hidden, hidden), jnp.float32) * 0.1
        w2 = jax.random.normal(ks[5], (hidden, lat_dim), jnp.float32) * 0.05

        # ---- algebraic folding: never materialize kron(I_P, w_enc_s) ----
        # zx = px @ kron(I_P, w_enc_s) + tile(b_enc_s, P), so
        #   zx @ w1 = px @ W1_eff + b1_eff  with
        #   W1_eff[p*Kp:(p+1)*Kp, :] = w_enc_s @ w1[p*Cz:(p+1)*Cz, :]
        #   b1_eff = b_enc_s @ sum_p w1[p*Cz:(p+1)*Cz, :]
        w1_r = w1.reshape(n_patches, latent_c, hidden)               # (P, Cz, H)
        w1_eff = jnp.einsum("kc,pch->pkh", w_enc_s, w1_r)
        w1_eff = w1_eff.reshape(n_patches * kp, hidden)              # (P*Kp, H)
        b1_eff = b_enc_s @ jnp.sum(w1_r, axis=0)                     # (1, H)
        c_proj = c @ wc                                              # (1, H) constant
        self.bias_h = (b1_eff + c_proj).astype(jnp.float32)

        # bf16 MXU operands (f32 accumulation inside the kernel)
        self.w_enc_b16 = w_enc_s.astype(jnp.bfloat16)                # (Kp, Cz)
        self.w1_eff_b16 = w1_eff.astype(jnp.bfloat16)                # (P*Kp, H)
        self.w2_b16 = w2.astype(jnp.bfloat16)                        # (H, lat_dim)

        # fixed diffusion noise target (deterministic stand-in for per-call randn),
        # cached per batch size so it is not regenerated every forward.
        self._noise_key = jax.random.PRNGKey(1234)
        self._noise_cache = {}

        # jit the whole forward: patchify + diff + kernel + mode combination
        # is a single XLA program / single dispatch per attack iteration.
        self._jit_forward = jax.jit(self._forward_impl)

    def _get_noise(self, n):
        if n not in self._noise_cache:
            self._noise_cache[n] = jax.random.normal(
                self._noise_key, (n, self.lat_dim), jnp.float32)
        return self._noise_cache[n]

    def _patchify(self, x_nchw):
        """NCHW image -> (N, P*Kp) flattened patch rows (lane-dense)."""
        x = jnp.transpose(x_nchw, (0, 2, 3, 1)).astype(jnp.float32)  # NHWC
        N, H, W, C = x.shape
        pa = self.patch
        Ho, Wo = H // pa, W // pa
        p = x.reshape(N, Ho, pa, Wo, pa, C).transpose(0, 1, 3, 2, 4, 5)
        return p.reshape(N, Ho * Wo * pa * pa * C)

    def _forward_impl(self, x_nchw, y_nchw, noise):
        px = self._patchify(x_nchw)                           # (N, P*Kp)
        py = self._patchify(y_nchw)
        # encoder bias cancels in the latent difference -> plain per-patch diff
        dp = (px - py).reshape(-1, self.kp)                   # (N*P, Kp)
        tex, sem = fused_forward(px, dp, self.w_enc_b16, self.w1_eff_b16,
                                 self.bias_h, self.w2_b16, noise)
        g_dir = 1.0 if self.g_mode == "+" else -1.0
        if self.mode == "advdm":
            combined = -sem * g_dir
        elif self.mode == "texture_only":
            combined = tex
        elif self.mode == "mist":
            combined = tex * g_dir - sem * self.rate
        elif self.mode == "texture_self_enhance":
            combined = -tex
        else:
            raise KeyError("mode not defined")
        return tex, sem, combined

    def forward(self, x_nchw, target_info_nchw, components=False):
        noise = self._get_noise(x_nchw.shape[0])
        tex, sem, combined = self._jit_forward(x_nchw, target_info_nchw, noise)
        if components:
            return tex, sem
        return combined


if __name__ == "__main__":
    key = jax.random.PRNGKey(0)
    k_model, k_x, k_y = jax.random.split(key, 3)

    B, C, HW = 2, 3, 16
    x = jax.random.uniform(k_x, (B, C, HW, HW), jnp.float32)            # input image
    target_info = jax.random.uniform(k_y, (B, C, HW, HW), jnp.float32)  # target image

    model = MistTargetModel(k_model, img_c=C, img_hw=HW,
                            mode="mist", rate=10000, g_mode="+")

    loss = model.forward(x, target_info)
    loss = jax.block_until_ready(loss)

    tex, sem = model.forward(x, target_info, components=True)
    jax.block_until_ready((tex, sem))

    assert jnp.isfinite(loss) and jnp.isfinite(tex) and jnp.isfinite(sem)
    print("KERNEL_OK")
</pallas_src>

<mosaic_0001>
module attributes {stable_mosaic.version = 11 : i64} {
  func.func @_fused_forward_kernel(%arg0: i32, %arg1: memref<2x768xf32, #tpu.memory_space<vmem>>, %arg2: memref<128x12xf32, #tpu.memory_space<vmem>>, %arg3: memref<12x4xbf16, #tpu.memory_space<vmem>>, %arg4: memref<768x32xbf16, #tpu.memory_space<vmem>>, %arg5: memref<1x32xf32, #tpu.memory_space<vmem>>, %arg6: memref<32x256xbf16, #tpu.memory_space<vmem>>, %arg7: memref<2x256xf32, #tpu.memory_space<vmem>>, %arg8: memref<1x2xf32, #tpu.memory_space<smem>>) attributes {dimension_semantics = [#tpu.dimension_semantics<arbitrary>], iteration_bounds = array<i64: 1>, scalar_prefetch = 0 : i64, scratch_operands = 0 : i64, tpu.core_type = #tpu.core_type<tc>, window_params = [{pipeline_mode = #tpu.pipeline_mode<synchronous>, transform_indices = @transform_0, window_bounds = array<i64: 2, 768>}, {pipeline_mode = #tpu.pipeline_mode<synchronous>, transform_indices = @transform_1, window_bounds = array<i64: 128, 12>}, {pipeline_mode = #tpu.pipeline_mode<synchronous>, transform_indices = @transform_2, window_bounds = array<i64: 12, 4>}, {pipeline_mode = #tpu.pipeline_mode<synchronous>, transform_indices = @transform_3, window_bounds = array<i64: 768, 32>}, {pipeline_mode = #tpu.pipeline_mode<synchronous>, transform_indices = @transform_4, window_bounds = array<i64: 1, 32>}, {pipeline_mode = #tpu.pipeline_mode<synchronous>, transform_indices = @transform_5, window_bounds = array<i64: 32, 256>}, {pipeline_mode = #tpu.pipeline_mode<synchronous>, transform_indices = @transform_6, window_bounds = array<i64: 2, 256>}, {transform_indices = @transform_7, window_bounds = array<i64: 1, 2>}]} {
    %c0 = arith.constant 0 : index
    %c0_0 = arith.constant 0 : index
    %0 = vector.load %arg2[%c0, %c0_0] : memref<128x12xf32, #tpu.memory_space<vmem>>, vector<128x12xf32>
    %1 = arith.truncf %0 : vector<128x12xf32> to vector<128x12xbf16>
    %c0_1 = arith.constant 0 : index
    %c0_2 = arith.constant 0 : index
    %2 = vector.load %arg3[%c0_1, %c0_2] : memref<12x4xbf16, #tpu.memory_space<vmem>>, vector<12x4xbf16>
    %cst = arith.constant dense<0.000000e+00> : vector<128x4xf32>
    %3 = tpu.matmul %1, %2, %cst {dimension_numbers = #tpu.dot_dimension_numbers<[1], [0], [0], [1], [0, 0, 1, 1], [], []>} : vector<128x12xbf16>, vector<12x4xbf16>, vector<128x4xf32> -> vector<128x4xf32>
    %4 = arith.mulf %3, %3 : vector<128x4xf32>
    %5 = vector.shape_cast %4 : vector<128x4xf32> to vector<1x128x4xf32>
    %cst_3 = arith.constant dense<0.000000e+00> : vector<1xf32>
    %6 = vector.multi_reduction <add>, %5, %cst_3 [1, 2] : vector<1x128x4xf32> to vector<1xf32>
    %7 = vector.shape_cast %6 : vector<1xf32> to vector<1x1x1xf32>
    %8 = vector.extract %7[0, 0, 0] : f32 from vector<1x1x1xf32>
    %c0_4 = arith.constant 0 : index
    %c0_5 = arith.constant 0 : index
    %9 = memref.load %arg8[%c0_4, %c0_5] : memref<1x2xf32, #tpu.memory_space<smem>>
    memref.store %8, %arg8[%c0_4, %c0_5] : memref<1x2xf32, #tpu.memory_space<smem>>
    %c0_6 = arith.constant 0 : index
    %c0_7 = arith.constant 0 : index
    %10 = vector.load %arg1[%c0_6, %c0_7] : memref<2x768xf32, #tpu.memory_space<vmem>>, vector<2x768xf32>
    %11 = arith.truncf %10 : vector<2x768xf32> to vector<2x768xbf16>
    %c0_8 = arith.constant 0 : index
    %c0_9 = arith.constant 0 : index
    %12 = vector.load %arg4[%c0_8, %c0_9] : memref<768x32xbf16, #tpu.memory_space<vmem>>, vector<768x32xbf16>
    %cst_10 = arith.constant dense<0.000000e+00> : vector<2x32xf32>
    %13 = tpu.matmul %11, %12, %cst_10 {dimension_numbers = #tpu.dot_dimension_numbers<[1], [0], [0], [1], [0, 0, 1, 1], [], []>} : vector<2x768xbf16>, vector<768x32xbf16>, vector<2x32xf32> -> vector<2x32xf32>
    %c0_11 = arith.constant 0 : index
    %c0_12 = arith.constant 0 : index
    %14 = vector.load %arg5[%c0_11, %c0_12] : memref<1x32xf32, #tpu.memory_space<vmem>>, vector<1x32xf32>
    %15 = vector.broadcast %14 : vector<1x32xf32> to vector<2x32xf32>
    %16 = arith.addf %13, %15 : vector<2x32xf32>
    %17 = math.tanh %16 : vector<2x32xf32>
    %18 = arith.truncf %17 : vector<2x32xf32> to vector<2x32xbf16>
    %c0_13 = arith.constant 0 : index
    %c0_14 = arith.constant 0 : index
    %19 = vector.load %arg6[%c0_13, %c0_14] : memref<32x256xbf16, #tpu.memory_space<vmem>>, vector<32x256xbf16>
    %cst_15 = arith.constant dense<0.000000e+00> : vector<2x256xf32>
    %20 = tpu.matmul %18, %19, %cst_15 {dimension_numbers = #tpu.dot_dimension_numbers<[1], [0], [0], [1], [0, 0, 1, 1], [], []>} : vector<2x32xbf16>, vector<32x256xbf16>, vector<2x256xf32> -> vector<2x256xf32>
    %c0_16 = arith.constant 0 : index
    %c0_17 = arith.constant 0 : index
    %21 = vector.load %arg7[%c0_16, %c0_17] : memref<2x256xf32, #tpu.memory_space<vmem>>, vector<2x256xf32>
    %22 = arith.subf %20, %21 : vector<2x256xf32>
    %23 = arith.mulf %22, %22 : vector<2x256xf32>
    %24 = vector.shape_cast %23 : vector<2x256xf32> to vector<1x2x256xf32>
    %cst_18 = arith.constant dense<0.000000e+00> : vector<1xf32>
    %25 = vector.multi_reduction <add>, %24, %cst_18 [1, 2] : vector<1x2x256xf32> to vector<1xf32>
    %26 = vector.shape_cast %25 : vector<1xf32> to vector<1x1x1xf32>
    %27 = vector.extract %26[0, 0, 0] : f32 from vector<1x1x1xf32>
    %cst_19 = arith.constant 0.001953125 : f32
    %28 = arith.mulf %27, %cst_19 : f32
    %c0_20 = arith.constant 0 : index
    %c1 = arith.constant 1 : index
    %29 = memref.load %arg8[%c0_20, %c1] : memref<1x2xf32, #tpu.memory_space<smem>>
    memref.store %28, %arg8[%c0_20, %c1] : memref<1x2xf32, #tpu.memory_space<smem>>
    return
  }
  func.func @transform_0(%arg0: i32) -> (i32, i32) {
    %c0_i32 = arith.constant 0 : i32
    %c0_i32_0 = arith.constant 0 : i32
    %c0_i32_1 = arith.constant 0 : i32
    return %c0_i32, %c0_i32_0 : i32, i32
  }
  func.func @transform_1(%arg0: i32) -> (i32, i32) {
    %c0_i32 = arith.constant 0 : i32
    %c0_i32_0 = arith.constant 0 : i32
    %c0_i32_1 = arith.constant 0 : i32
    return %c0_i32, %c0_i32_0 : i32, i32
  }
  func.func @transform_2(%arg0: i32) -> (i32, i32) {
    %c0_i32 = arith.constant 0 : i32
    %c0_i32_0 = arith.constant 0 : i32
    %c0_i32_1 = arith.constant 0 : i32
    return %c0_i32, %c0_i32_0 : i32, i32
  }
  func.func @transform_3(%arg0: i32) -> (i32, i32) {
    %c0_i32 = arith.constant 0 : i32
    %c0_i32_0 = arith.constant 0 : i32
    %c0_i32_1 = arith.constant 0 : i32
    return %c0_i32, %c0_i32_0 : i32, i32
  }
  func.func @transform_4(%arg0: i32) -> (i32, i32) {
    %c0_i32 = arith.constant 0 : i32
    %c0_i32_0 = arith.constant 0 : i32
    %c0_i32_1 = arith.constant 0 : i32
    return %c0_i32, %c0_i32_0 : i32, i32
  }
  func.func @transform_5(%arg0: i32) -> (i32, i32) {
    %c0_i32 = arith.constant 0 : i32
    %c0_i32_0 = arith.constant 0 : i32
    %c0_i32_1 = arith.constant 0 : i32
    return %c0_i32, %c0_i32_0 : i32, i32
  }
  func.func @transform_6(%arg0: i32) -> (i32, i32) {
    %c0_i32 = arith.constant 0 : i32
    %c0_i32_0 = arith.constant 0 : i32
    %c0_i32_1 = arith.constant 0 : i32
    return %c0_i32, %c0_i32_0 : i32, i32
  }
  func.func @transform_7(%arg0: i32) -> (i32, i32) {
    %c0_i32 = arith.constant 0 : i32
    %c0_i32_0 = arith.constant 0 : i32
    %c0_i32_1 = arith.constant 0 : i32
    return %c0_i32, %c0_i32_0 : i32, i32
  }
}

</mosaic_0001>

<llo_original>
// kernel: _forward_impl.1
$region0: #{_forward_impl.1}
  #allocation0 [shape = 'u32[]', space=smem, size = 0x4, offset = 0x4, fixed_abs, tag = 'smem constant byte address 0x4 - core index']
  #allocation1 [shape = 'u32[144,128]{1,0:T(1,128)}', space=vmem, size = 0x12000, scoped, tag = 'internal scratch']
  %s0 = inlined_call_operand.vmem [shape: f32[2,768], index: 0, kind: input, shape index: {}]
  %s1 = inlined_call_operand.vmem [shape: f32[128,12], index: 1, kind: input, shape index: {}]
  %s2 = inlined_call_operand.vmem [shape: bf16[12,4], index: 2, kind: input, shape index: {}]
  %s3 = inlined_call_operand.vmem [shape: bf16[768,32], index: 3, kind: input, shape index: {}]
  %s4 = inlined_call_operand.vmem [shape: f32[1,32], index: 4, kind: input, shape index: {}]
  %s5 = inlined_call_operand.vmem [shape: bf16[32,256], index: 5, kind: input, shape index: {}]
  %s6 = inlined_call_operand.vmem [shape: f32[2,256], index: 6, kind: input, shape index: {}]
  %s7 = inlined_call_operand.vmem [shape: f32[1,2], index: 7, kind: output, shape index: {}]
  %s8 = sld [smem:[#allocation0]]
  $region38: #{_forward_impl.1} parent=0
    _
  %s10 = ssub.s32 1, %s8
  %s11 = scalar_select 0, %s10, %s8
  $region1: #{_forward_impl.1} parent=0
    #allocation2 [shape = 'u8[512]{0}', space=smem, size = 0x200, scoped, tag = 'output window, operand 0, single buffered']
    #allocation3 [shape = 's32[1]{0}', space=sflag, size = 0x4, scoped, tag = 'scoped memory for _forward_impl.1']
    %12 = vsyncpa [#allocation3], 0
    // Predicated region
    $region2: #{_forward_impl.1} parent=1 // pred_check
      _
    $region3: #{_forward_impl.1} parent=1 // pred_check_branch
      %14 = sbr.rel (0) target = $region5
    $region4: #{_forward_impl.1} parent=1 // pred_region
      _
    $region5: #{_forward_impl.1} parent=1 // pred_fallthru
      _
    // Predicated region
    $region6: #{_forward_impl.1} parent=1 // pred_check
      _
    $region7: #{_forward_impl.1} parent=1 // pred_check_branch
      %16 = sbr.rel (0) target = $region9
    $region8: #{_forward_impl.1} parent=1 // pred_region
      _
    $region9: #{_forward_impl.1} parent=1 // pred_fallthru
      _
    // Predicated region
    $region10: #{_forward_impl.1} parent=1 // pred_check
      _
    $region11: #{_forward_impl.1} parent=1 // pred_check_branch
      %18 = sbr.rel (0) target = $region13
    $region12: #{_forward_impl.1} parent=1 // pred_region
      _
    $region13: #{_forward_impl.1} parent=1 // pred_fallthru
      _
    // Predicated region
    $region14: #{_forward_impl.1} parent=1 // pred_check
      _
    $region15: #{_forward_impl.1} parent=1 // pred_check_branch
      %20 = sbr.rel (0) target = $region17
    $region16: #{_forward_impl.1} parent=1 // pred_region
      _
    $region17: #{_forward_impl.1} parent=1 // pred_fallthru
      _
    // Predicated region
    $region18: #{_forward_impl.1} parent=1 // pred_check
      _
    $region19: #{_forward_impl.1} parent=1 // pred_check_branch
      %22 = sbr.rel (0) target = $region21
    $region20: #{_forward_impl.1} parent=1 // pred_region
      _
    $region21: #{_forward_impl.1} parent=1 // pred_fallthru
      _
    // Predicated region
    $region22: #{_forward_impl.1} parent=1 // pred_check
      _
    $region23: #{_forward_impl.1} parent=1 // pred_check_branch
      %24 = sbr.rel (0) target = $region25
    $region24: #{_forward_impl.1} parent=1 // pred_region
      _
    $region25: #{_forward_impl.1} parent=1 // pred_fallthru
      _
    // Predicated region
    $region26: #{_forward_impl.1} parent=1 // pred_check
      _
    $region27: #{_forward_impl.1} parent=1 // pred_check_branch
      %26 = sbr.rel (0) target = $region29
    $region28: #{_forward_impl.1} parent=1 // pred_region
      _
    $region29: #{_forward_impl.1} parent=1 // pred_fallthru
      _
    %v28 = vld [vmem:[%s1] sm:$0xff]
    %v29 = vld [vmem:[%s1 + $0x8] sm:$0xff]
    %v30 = vld [vmem:[%s1 + $0x10] sm:$0xff]
    %v31 = vld [vmem:[%s1 + $0x18] sm:$0xff]
    %v32 = vld [vmem:[%s1 + $0x20] sm:$0xff]
    %v33 = vld [vmem:[%s1 + $0x28] sm:$0xff]
    %v34 = vld [vmem:[%s1 + $0x30] sm:$0xff]
    %v35 = vld [vmem:[%s1 + $0x38] sm:$0xff]
    %v36 = vld [vmem:[%s1 + $0x40] sm:$0xff]
    %v37 = vld [vmem:[%s1 + $0x48] sm:$0xff]
    %v38 = vld [vmem:[%s1 + $0x50] sm:$0xff]
    %v39 = vld [vmem:[%s1 + $0x58] sm:$0xff]
    %v40 = vld [vmem:[%s1 + $0x60] sm:$0xff]
    %v41 = vld [vmem:[%s1 + $0x68] sm:$0xff]
    %v42 = vld [vmem:[%s1 + $0x70] sm:$0xff]
    %v43 = vld [vmem:[%s1 + $0x78] sm:$0xff]
    %v44 = vpack.c.bf16 %v29, %v28
    %v45 = vpack.c.bf16 %v31, %v30
    %v46 = vpack.c.bf16 %v33, %v32
    %v47 = vpack.c.bf16 %v35, %v34
    %v48 = vpack.c.bf16 %v37, %v36
    %v49 = vpack.c.bf16 %v39, %v38
    %v50 = vpack.c.bf16 %v41, %v40
    %v51 = vpack.c.bf16 %v43, %v42
    %v52 = vld [vmem:[%s2] sm:$0xf]
    %v53 = vld [vmem:[%s2 + $0x4] sm:$0x3]
    %v56 = vunpack.c.l.b16 %v52
    %v57 = vunpack.c.l.b16 %v53
    %v58 = vpack.c.b16 %v57, %v56
    %vm59 = vcmask 97280
    %v61 = vsel %vm59, %v44, 0
    %v64 = vsel %vm59, %v45, 0
    %v67 = vsel %vm59, %v46, 0
    %v70 = vsel %vm59, %v47, 0
    %v73 = vsel %vm59, %v48, 0
    %v76 = vsel %vm59, %v49, 0
    %v79 = vsel %vm59, %v50, 0
    %v82 = vsel %vm59, %v51, 0
    %vm84 = vcmask 1045504
    %v86 = vsel %vm84, %v58, 0
    %88 = vmatprep.subr.bf16.mxu0 0
    %89 = vmatpush1.bf16.msra.mxu0 %v86
    %90 = vmatprep.subr.bf16.mxu0 0
    %91 = vmatpush1.bf16.msra.mxu0 0
    %92 = vmatprep.subr.bf16.mxu0 0
    %93 = vmatpush1.bf16.msra.mxu0 0
    %94 = vmatprep.subr.bf16.mxu0 0
    %95 = vmatpush1.bf16.msra.mxu0 0
    %96 = vmatprep.subr.bf16.mxu0 0
    %97 = vmatpush1.bf16.msra.mxu0 0
    %98 = vmatprep.subr.bf16.mxu0 0
    %99 = vmatpush1.bf16.msra.mxu0 0
    %100 = vmatprep.subr.bf16.mxu0 0
    %101 = vmatpush1.bf16.msra.mxu0 0
    %102 = vmatprep.subr.bf16.mxu0 0
    %103 = vmatpush1.bf16.msra.mxu0 0
    %104 = vmatprep.subr.bf16.mxu0 0
    %105 = vmatpush1.bf16.msra.mxu0 0
    %106 = vmatprep.subr.bf16.mxu0 0
    %107 = vmatpush1.bf16.msra.mxu0 0
    %108 = vmatprep.subr.bf16.mxu0 0
    %109 = vmatpush1.bf16.msra.mxu0 0
    %110 = vmatprep.subr.bf16.mxu0 0
    %111 = vmatpush1.bf16.msra.mxu0 0
    %112 = vmatprep.subr.bf16.mxu0 0
    %113 = vmatpush1.bf16.msra.mxu0 0
    %114 = vmatprep.subr.bf16.mxu0 0
    %115 = vmatpush1.bf16.msra.mxu0 0
    %116 = vmatprep.subr.bf16.mxu0 0
    %117 = vmatpush1.bf16.msra.mxu0 0
    %118 = vmatprep.subr.bf16.mxu0 0
    %119 = vmatpush1.bf16.msra.mxu0 0
    %120 = vmatprep.mubr.bf16.mxu0 0
    %121 = vmatmul.mubr.bf16.gmra.mrb[0].mxu0 %v61
    %v122 = vpop.f32.mrb[0].mxu0
    %v123 = vadd.f32 0.0, %v122
    %v124 = vpop.f32.mrb[0].mxu0
    %v125 = vpop.f32.mrb[0].mxu0
    %v126 = vadd.f32 0.0, %v125
    %v127 = vpop.f32.mrb[0].mxu0
    %128 = vmatprep.mubr.bf16.mxu0 0
    %129 = vmatmul.mubr.bf16.gmra.mrb[0].mxu0 %v64
    %v130 = vpop.f32.mrb[0].mxu0
    %v131 = vadd.f32 0.0, %v130
    %v132 = vpop.f32.mrb[0].mxu0
    %v133 = vpop.f32.mrb[0].mxu0
    %v134 = vadd.f32 0.0, %v133
    %v135 = vpop.f32.mrb[0].mxu0
    %136 = vmatprep.mubr.bf16.mxu0 0
    %137 = vmatmul.mubr.bf16.gmra.mrb[0].mxu0 %v67
    %v138 = vpop.f32.mrb[0].mxu0
    %v139 = vadd.f32 0.0, %v138
    %v140 = vpop.f32.mrb[0].mxu0
    %v141 = vpop.f32.mrb[0].mxu0
    %v142 = vadd.f32 0.0, %v141
    %v143 = vpop.f32.mrb[0].mxu0
    %144 = vmatprep.mubr.bf16.mxu0 0
    %145 = vmatmul.mubr.bf16.gmra.mrb[0].mxu0 %v70
    %v146 = vpop.f32.mrb[0].mxu0
    %v147 = vadd.f32 0.0, %v146
    %v148 = vpop.f32.mrb[0].mxu0
    %v149 = vpop.f32.mrb[0].mxu0
    %v150 = vadd.f32 0.0, %v149
    %v151 = vpop.f32.mrb[0].mxu0
    %152 = vmatprep.mubr.bf16.mxu0 0
    %153 = vmatmul.mubr.bf16.gmra.mrb[0].mxu0 %v73
    %v154 = vpop.f32.mrb[0].mxu0
    %v155 = vadd.f32 0.0, %v154
    %v156 = vpop.f32.mrb[0].mxu0
    %v157 = vpop.f32.mrb[0].mxu0
    %v158 = vadd.f32 0.0, %v157
    %v159 = vpop.f32.mrb[0].mxu0
    %160 = vmatprep.mubr.bf16.mxu0 0
    %161 = vmatmul.mubr.bf16.gmra.mrb[0].mxu0 %v76
    %v162 = vpop.f32.mrb[0].mxu0
    %v163 = vadd.f32 0.0, %v162
    %v164 = vpop.f32.mrb[0].mxu0
    %v165 = vpop.f32.mrb[0].mxu0
    %v166 = vadd.f32 0.0, %v165
    %v167 = vpop.f32.mrb[0].mxu0
    %168 = vmatprep.mubr.bf16.mxu0 0
    %169 = vmatmul.mubr.bf16.gmra.mrb[0].mxu0 %v79
    %v170 = vpop.f32.mrb[0].mxu0
    %v171 = vadd.f32 0.0, %v170
    %v172 = vpop.f32.mrb[0].mxu0
    %v173 = vpop.f32.mrb[0].mxu0
    %v174 = vadd.f32 0.0, %v173
    %v175 = vpop.f32.mrb[0].mxu0
    %176 = vmatprep.mubr.bf16.mxu0 0
    %177 = vmatmul.mubr.bf16.gmra.mrb[0].mxu0 %v82
    %v178 = vpop.f32.mrb[0].mxu0
    %v179 = vadd.f32 0.0, %v178
    %v180 = vpop.f32.mrb[0].mxu0
    %v181 = vpop.f32.mrb[0].mxu0
    %v182 = vadd.f32 0.0, %v181
    %v183 = vpop.f32.mrb[0].mxu0
    %184 = vdwg.mxu0
    %v185 = vmul.f32 %v123, %v123
    %v186 = vmul.f32 %v126, %v126
    %v187 = vmul.f32 %v131, %v131
    %v188 = vmul.f32 %v134, %v134
    %v189 = vmul.f32 %v139, %v139
    %v190 = vmul.f32 %v142, %v142
    %v191 = vmul.f32 %v147, %v147
    %v192 = vmul.f32 %v150, %v150
    %v193 = vmul.f32 %v155, %v155
    %v194 = vmul.f32 %v158, %v158
    %v195 = vmul.f32 %v163, %v163
    %v196 = vmul.f32 %v166, %v166
    %v197 = vmul.f32 %v171, %v171
    %v198 = vmul.f32 %v174, %v174
    %v199 = vmul.f32 %v179, %v179
    %v200 = vmul.f32 %v182, %v182
    %vm201 = vcmask 31744
    %v202 = vsel %vm201, %v185, 0.0
    %v203 = vsel %vm201, %v186, 0.0
    %v204 = vadd.f32 %v202, %v203
    %v205 = vsel %vm201, %v187, 0.0
    %v206 = vadd.f32 %v204, %v205
    %v207 = vsel %vm201, %v188, 0.0
    %v208 = vadd.f32 %v206, %v207
    %v209 = vsel %vm201, %v189, 0.0
    %v210 = vadd.f32 %v208, %v209
    %v211 = vsel %vm201, %v190, 0.0
    %v212 = vadd.f32 %v210, %v211
    %v213 = vsel %vm201, %v191, 0.0
    %v214 = vadd.f32 %v212, %v213
    %v215 = vsel %vm201, %v192, 0.0
    %v216 = vadd.f32 %v214, %v215
    %v217 = vsel %vm201, %v193, 0.0
    %v218 = vadd.f32 %v216, %v217
    %v219 = vsel %vm201, %v194, 0.0
    %v220 = vadd.f32 %v218, %v219
    %v221 = vsel %vm201, %v195, 0.0
    %v222 = vadd.f32 %v220, %v221
    %v223 = vsel %vm201, %v196, 0.0
    %v224 = vadd.f32 %v222, %v223
    %v225 = vsel %vm201, %v197, 0.0
    %v226 = vadd.f32 %v224, %v225
    %v227 = vsel %vm201, %v198, 0.0
    %v228 = vadd.f32 %v226, %v227
    %v229 = vsel %vm201, %v199, 0.0
    %v230 = vadd.f32 %v228, %v229
    %v231 = vsel %vm201, %v200, 0.0
    %v232 = vadd.f32 %v230, %v231
    %233 = vadd.xlane.f32.xlu0 %v232
    %v234 = vpop.xlane.xlu0 %233
    %v235 = vrot.slane %v234, 4
    %v236 = vadd.f32 %v234, %v235
    %v237 = vrot.slane %v236, 2
    %v238 = vadd.f32 %v236, %v237
    %v239 = vrot.slane %v238, 1
    %v240 = vadd.f32 %v238, %v239
    %s241 = vtos %v240
    %s242 = scalar_lea.smem [#allocation2], 0
    %243 = sst [smem:[%s242]] %s241
    %v244 = vld [vmem:[%s0] sm:$0xff]
    %v245 = vld [vmem:[%s0 + $0x8] sm:$0xf]
    %v248 = vcombine.high %v244, %v244
    %v250 = vunpack.c.l.s4 1983009808
    %v251 = vunpack.c.0.s8 %v250
    %v252 = vlaneseq
    %v253 = vshrl.u32 %v252, 7
    %v254 = vsub.s32 %v251, %v253
    %v255 = vrot.slane %v244, %v254
    %v257 = vunpack.c.l.s4 1983009808
    %v258 = vunpack.c.0.s8 %v257
    %v259 = vlaneseq
    %v260 = vshrl.u32 %v259, 7
    %v261 = vsub.s32 %v258, %v260
    %v262 = vrot.slane %v248, %v261
    %v263 = vcombine.high %v255, %v255
    %v264 = vcombine.high %v262, %v262
    %v266 = vunpack.c.l.s4 1983009808
    %v267 = vunpack.c.0.s8 %v266
    %v268 = vlaneseq
    %v269 = vshrl.u32 %v268, 7
    %v270 = vsub.s32 %v267, %v269
    %v271 = vrot.slane %v245, %v270
    %v272 = vcombine.high %v271, %v271
    %v279 = vpack.c.bf16 %v255, %v255
    %v280 = vpack.c.bf16 %v263, %v263
    %v281 = vpack.c.bf16 %v262, %v262
    %v282 = vpack.c.bf16 %v264, %v264
    %v283 = vpack.c.bf16 %v271, %v271
    %v284 = vpack.c.bf16 %v272, %v272
    %v285 = vld [vmem:[%s3] sm:$0xf]
    %v286 = vld [vmem:[%s3 + $0x4] sm:$0xf]
    %v287 = vld [vmem:[%s3 + $0x8] sm:$0xf]
    %v288 = vld [vmem:[%s3 + $0xc] sm:$0xf]
    %v289 = vld [vmem:[%s3 + $0x10] sm:$0xf]
    %v290 = vld [vmem:[%s3 + $0x14] sm:$0xf]
    %v291 = vld [vmem:[%s3 + $0x18] sm:$0xf]
    %v292 = vld [vmem:[%s3 + $0x1c] sm:$0xf]
    %v293 = vld [vmem:[%s3 + $0x20] sm:$0xf]
    %v294 = vld [vmem:[%s3 + $0x24] sm:$0xf]
    %v295 = vld [vmem:[%s3 + $0x28] sm:$0xf]
    %v296 = vld [vmem:[%s3 + $0x2c] sm:$0xf]
    %v297 = vld [vmem:[%s3 + $0x30] sm:$0xf]
    %v298 = vld [vmem:[%s3 + $0x34] sm:$0xf]
    %v299 = vld [vmem:[%s3 + $0x38] sm:$0xf]
    %v300 = vld [vmem:[%s3 + $0x3c] sm:$0xf]
    %v301 = vld [vmem:[%s3 + $0x40] sm:$0xf]
    %v302 = vld [vmem:[%s3 + $0x44] sm:$0xf]
    %v303 = vld [vmem:[%s3 + $0x48] sm:$0xf]
    %v304 = vld [vmem:[%s3 + $0x4c] sm:$0xf]
    %v305 = vld [vmem:[%s3 + $0x50] sm:$0xf]
    %v306 = vld [vmem:[%s3 + $0x54] sm:$0xf]
    %v307 = vld [vmem:[%s3 + $0x58] sm:$0xf]
    %v308 = vld [vmem:[%s3 + $0x5c] sm:$0xf]
    %v309 = vld [vmem:[%s3 + $0x60] sm:$0xf]
    %v310 = vld [vmem:[%s3 + $0x64] sm:$0xf]
    %v311 = vld [vmem:[%s3 + $0x68] sm:$0xf]
    %v312 = vld [vmem:[%s3 + $0x6c] sm:$0xf]
    %v313 = vld [vmem:[%s3 + $0x70] sm:$0xf]
    %v314 = vld [vmem:[%s3 + $0x74] sm:$0xf]
    %v315 = vld [vmem:[%s3 + $0x78] sm:$0xf]
    %v316 = vld [vmem:[%s3 + $0x7c] sm:$0xf]
    %v317 = vld [vmem:[%s3 + $0x80] sm:$0xf]
    %v318 = vld [vmem:[%s3 + $0x84] sm:$0xf]
    %v319 = vld [vmem:[%s3 + $0x88] sm:$0xf]
    %v320 = vld [vmem:[%s3 + $0x8c] sm:$0xf]
    %v321 = vld [vmem:[%s3 + $0x90] sm:$0xf]
    %v322 = vld [vmem:[%s3 + $0x94] sm:$0xf]
    %v323 = vld [vmem:[%s3 + $0x98] sm:$0xf]
    %v324 = vld [vmem:[%s3 + $0x9c] sm:$0xf]
    %v325 = vld [vmem:[%s3 + $0xa0] sm:$0xf]
    %v326 = vld [vmem:[%s3 + $0xa4] sm:$0xf]
    %v327 = vld [vmem:[%s3 + $0xa8] sm:$0xf]
    %v328 = vld [vmem:[%s3 + $0xac] sm:$0xf]
    %v329 = vld [vmem:[%s3 + $0xb0] sm:$0xf]
    %v330 = vld [vmem:[%s3 + $0xb4] sm:$0xf]
    %v331 = vld [vmem:[%s3 + $0xb8] sm:$0xf]
    %v332 = vld [vmem:[%s3 + $0xbc] sm:$0xf]
    %v333 = vld [vmem:[%s3 + $0xc0] sm:$0xf]
    %v334 = vld [vmem:[%s3 + $0xc4] sm:$0xf]
    %v335 = vld [vmem:[%s3 + $0xc8] sm:$0xf]
    %v336 = vld [vmem:[%s3 + $0xcc] sm:$0xf]
    %v337 = vld [vmem:[%s3 + $0xd0] sm:$0xf]
    %v338 = vld [vmem:[%s3 + $0xd4] sm:$0xf]
    %v339 = vld [vmem:[%s3 + $0xd8] sm:$0xf]
    %v340 = vld [vmem:[%s3 + $0xdc] sm:$0xf]
    %v341 = vld [vmem:[%s3 + $0xe0] sm:$0xf]
    %v342 = vld [vmem:[%s3 + $0xe4] sm:$0xf]
    %v343 = vld [vmem:[%s3 + $0xe8] sm:$0xf]
    %v344 = vld [vmem:[%s3 + $0xec] sm:$0xf]
    %v345 = vld [vmem:[%s3 + $0xf0] sm:$0xf]
    %v346 = vld [vmem:[%s3 + $0xf4] sm:$0xf]
    %v347 = vld [vmem:[%s3 + $0xf8] sm:$0xf]
    %v348 = vld [vmem:[%s3 + $0xfc] sm:$0xf]
    %v349 = vld [vmem:[%s3 + $0x100] sm:$0xf]
    %v350 = vld [vmem:[%s3 + $0x104] sm:$0xf]
    %v351 = vld [vmem:[%s3 + $0x108] sm:$0xf]
    %v352 = vld [vmem:[%s3 + $0x10c] sm:$0xf]
    %v353 = vld [vmem:[%s3 + $0x110] sm:$0xf]
    %v354 = vld [vmem:[%s3 + $0x114] sm:$0xf]
    %v355 = vld [vmem:[%s3 + $0x118] sm:$0xf]
    %v356 = vld [vmem:[%s3 + $0x11c] sm:$0xf]
    %v357 = vld [vmem:[%s3 + $0x120] sm:$0xf]
    %v358 = vld [vmem:[%s3 + $0x124] sm:$0xf]
    %v359 = vld [vmem:[%s3 + $0x128] sm:$0xf]
    %v360 = vld [vmem:[%s3 + $0x12c] sm:$0xf]
    %v361 = vld [vmem:[%s3 + $0x130] sm:$0xf]
    %v362 = vld [vmem:[%s3 + $0x134] sm:$0xf]
    %v363 = vld [vmem:[%s3 + $0x138] sm:$0xf]
    %v364 = vld [vmem:[%s3 + $0x13c] sm:$0xf]
    %v365 = vld [vmem:[%s3 + $0x140] sm:$0xf]
    %v366 = vld [vmem:[%s3 + $0x144] sm:$0xf]
    %v367 = vld [vmem:[%s3 + $0x148] sm:$0xf]
    %v368 = vld [vmem:[%s3 + $0x14c] sm:$0xf]
    %v369 = vld [vmem:[%s3 + $0x150] sm:$0xf]
    %v370 = vld [vmem:[%s3 + $0x154] sm:$0xf]
    %v371 = vld [vmem:[%s3 + $0x158] sm:$0xf]
    %v372 = vld [vmem:[%s3 + $0x15c] sm:$0xf]
    %v373 = vld [vmem:[%s3 + $0x160] sm:$0xf]
    %v374 = vld [vmem:[%s3 + $0x164] sm:$0xf]
    %v375 = vld [vmem:[%s3 + $0x168] sm:$0xf]
    %v376 = vld [vmem:[%s3 + $0x16c] sm:$0xf]
    %v377 = vld [vmem:[%s3 + $0x170] sm:$0xf]
    %v378 = vld [vmem:[%s3 + $0x174] sm:$0xf]
    %v379 = vld [vmem:[%s3 + $0x178] sm:$0xf]
    %v380 = vld [vmem:[%s3 + $0x17c] sm:$0xf]
    %v381 = vld [vmem:[%s4] sm:$0x1]
    %v383 = vlaneseq
    %v384 = vshrl.u32 %v383, 7
    %v385 = vsub.s32 0, %v384
    %v386 = vrot.slane %v381, %v385
    %v484 = vunpack.c.l.b16 %v285
    %v485 = vunpack.c.l.b16 %v286
    %v486 = vunpack.c.l.b16 %v287
    %v487 = vunpack.c.l.b16 %v288
    %v488 = vunpack.c.l.b16 %v289
    %v489 = vunpack.c.l.b16 %v290
    %v490 = vunpack.c.l.b16 %v291
    %v491 = vunpack.c.l.b16 %v292
    %v492 = vunpack.c.l.b16 %v293
    %v493 = vunpack.c.l.b16 %v294
    %v494 = vunpack.c.l.b16 %v295
    %v495 = vunpack.c.l.b16 %v296
    %v496 = vunpack.c.l.b16 %v297
    %v497 = vunpack.c.l.b16 %v298
    %v498 = vunpack.c.l.b16 %v299
    %v499 = vunpack.c.l.b16 %v300
    %v500 = vunpack.c.l.b16 %v301
    %v501 = vunpack.c.l.b16 %v302
    %v502 = vunpack.c.l.b16 %v303
    %v503 = vunpack.c.l.b16 %v304
    %v504 = vunpack.c.l.b16 %v305
    %v505 = vunpack.c.l.b16 %v306
    %v506 = vunpack.c.l.b16 %v307
    %v507 = vunpack.c.l.b16 %v308
    %v508 = vunpack.c.l.b16 %v309
    %v509 = vunpack.c.l.b16 %v310
    %v510 = vunpack.c.l.b16 %v311
    %v511 = vunpack.c.l.b16 %v312
    %v512 = vunpack.c.l.b16 %v313
    %v513 = vunpack.c.l.b16 %v314
    %v514 = vunpack.c.l.b16 %v315
    %v515 = vunpack.c.l.b16 %v316
    %v516 = vunpack.c.l.b16 %v317
    %v517 = vunpack.c.l.b16 %v318
    %v518 = vunpack.c.l.b16 %v319
    %v519 = vunpack.c.l.b16 %v320
    %v520 = vunpack.c.l.b16 %v321
    %v521 = vunpack.c.l.b16 %v322
    %v522 = vunpack.c.l.b16 %v323
    %v523 = vunpack.c.l.b16 %v324
    %v524 = vunpack.c.l.b16 %v325
    %v525 = vunpack.c.l.b16 %v326
    %v526 = vunpack.c.l.b16 %v327
    %v527 = vunpack.c.l.b16 %v328
    %v528 = vunpack.c.l.b16 %v329
    %v529 = vunpack.c.l.b16 %v330
    %v530 = vunpack.c.l.b16 %v331
    %v531 = vunpack.c.l.b16 %v332
    %v532 = vunpack.c.l.b16 %v333
    %v533 = vunpack.c.l.b16 %v334
    %v534 = vunpack.c.l.b16 %v335
    %v535 = vunpack.c.l.b16 %v336
    %v536 = vunpack.c.l.b16 %v337
    %v537 = vunpack.c.l.b16 %v338
    %v538 = vunpack.c.l.b16 %v339
    %v539 = vunpack.c.l.b16 %v340
    %v540 = vunpack.c.l.b16 %v341
    %v541 = vunpack.c.l.b16 %v342
    %v542 = vunpack.c.l.b16 %v343
    %v543 = vunpack.c.l.b16 %v344
    %v544 = vunpack.c.l.b16 %v345
    %v545 = vunpack.c.l.b16 %v346
    %v546 = vunpack.c.l.b16 %v347
    %v547 = vunpack.c.l.b16 %v348
    %v548 = vunpack.c.l.b16 %v349
    %v549 = vunpack.c.l.b16 %v350
    %v550 = vunpack.c.l.b16 %v351
    %v551 = vunpack.c.l.b16 %v352
    %v552 = vunpack.c.l.b16 %v353
    %v553 = vunpack.c.l.b16 %v354
    %v554 = vunpack.c.l.b16 %v355
    %v555 = vunpack.c.l.b16 %v356
    %v556 = vunpack.c.l.b16 %v357
    %v557 = vunpack.c.l.b16 %v358
    %v558 = vunpack.c.l.b16 %v359
    %v559 = vunpack.c.l.b16 %v360
    %v560 = vunpack.c.l.b16 %v361
    %v561 = vunpack.c.l.b16 %v362
    %v562 = vunpack.c.l.b16 %v363
    %v563 = vunpack.c.l.b16 %v364
    %v564 = vunpack.c.l.b16 %v365
    %v565 = vunpack.c.l.b16 %v366
    %v566 = vunpack.c.l.b16 %v367
    %v567 = vunpack.c.l.b16 %v368
    %v568 = vunpack.c.l.b16 %v369
    %v569 = vunpack.c.l.b16 %v370
    %v570 = vunpack.c.l.b16 %v371
    %v571 = vunpack.c.l.b16 %v372
    %v572 = vunpack.c.l.b16 %v373
    %v573 = vunpack.c.l.b16 %v374
    %v574 = vunpack.c.l.b16 %v375
    %v575 = vunpack.c.l.b16 %v376
    %v576 = vunpack.c.l.b16 %v377
    %v577 = vunpack.c.l.b16 %v378
    %v578 = vunpack.c.l.b16 %v379
    %v579 = vunpack.c.l.b16 %v380
    %v580 = vpack.c.b16 %v485, %v484
    %v581 = vpack.c.b16 %v487, %v486
    %v582 = vpack.c.b16 %v489, %v488
    %v583 = vpack.c.b16 %v491, %v490
    %v584 = vpack.c.b16 %v493, %v492
    %v585 = vpack.c.b16 %v495, %v494
    %v586 = vpack.c.b16 %v497, %v496
    %v587 = vpack.c.b16 %v499, %v498
    %v588 = vpack.c.b16 %v501, %v500
    %v589 = vpack.c.b16 %v503, %v502
    %v590 = vpack.c.b16 %v505, %v504
    %v591 = vpack.c.b16 %v507, %v506
    %v592 = vpack.c.b16 %v509, %v508
    %v593 = vpack.c.b16 %v511, %v510
    %v594 = vpack.c.b16 %v513, %v512
    %v595 = vpack.c.b16 %v515, %v514
    %v596 = vpack.c.b16 %v517, %v516
    %v597 = vpack.c.b16 %v519, %v518
    %v598 = vpack.c.b16 %v521, %v520
    %v599 = vpack.c.b16 %v523, %v522
    %v600 = vpack.c.b16 %v525, %v524
    %v601 = vpack.c.b16 %v527, %v526
    %v602 = vpack.c.b16 %v529, %v528
    %v603 = vpack.c.b16 %v531, %v530
    %v604 = vpack.c.b16 %v533, %v532
    %v605 = vpack.c.b16 %v535, %v534
    %v606 = vpack.c.b16 %v537, %v536
    %v607 = vpack.c.b16 %v539, %v538
    %v608 = vpack.c.b16 %v541, %v540
    %v609 = vpack.c.b16 %v543, %v542
    %v610 = vpack.c.b16 %v545, %v544
    %v611 = vpack.c.b16 %v547, %v546
    %v612 = vpack.c.b16 %v549, %v548
    %v613 = vpack.c.b16 %v551, %v550
    %v614 = vpack.c.b16 %v553, %v552
    %v615 = vpack.c.b16 %v555, %v554
    %v616 = vpack.c.b16 %v557, %v556
    %v617 = vpack.c.b16 %v559, %v558
    %v618 = vpack.c.b16 %v561, %v560
    %v619 = vpack.c.b16 %v563, %v562
    %v620 = vpack.c.b16 %v565, %v564
    %v621 = vpack.c.b16 %v567, %v566
    %v622 = vpack.c.b16 %v569, %v568
    %v623 = vpack.c.b16 %v571, %v570
    %v624 = vpack.c.b16 %v573, %v572
    %v625 = vpack.c.b16 %v575, %v574
    %v626 = vpack.c.b16 %v577, %v576
    %v627 = vpack.c.b16 %v579, %v578
    %676 = vmatprep.subr.bf16.mxu0 0
    %677 = vmatpush1.bf16.msra.mxu0 %v580
    %678 = vmatprep.subr.bf16.mxu0 0
    %679 = vmatpush1.bf16.msra.mxu0 %v581
    %680 = vmatprep.subr.bf16.mxu0 0
    %681 = vmatpush1.bf16.msra.mxu0 %v582
    %682 = vmatprep.subr.bf16.mxu0 0
    %683 = vmatpush1.bf16.msra.mxu0 %v583
    %684 = vmatprep.subr.bf16.mxu0 0
    %685 = vmatpush1.bf16.msra.mxu0 %v584
    %686 = vmatprep.subr.bf16.mxu0 0
    %687 = vmatpush1.bf16.msra.mxu0 %v585
    %688 = vmatprep.subr.bf16.mxu0 0
    %689 = vmatpush1.bf16.msra.mxu0 %v586
    %690 = vmatprep.subr.bf16.mxu0 0
    %691 = vmatpush1.bf16.msra.mxu0 %v587
    %692 = vmatprep.subr.bf16.mxu0 0
    %693 = vmatpush1.bf16.msra.mxu0 %v588
    %694 = vmatprep.subr.bf16.mxu0 0
    %695 = vmatpush1.bf16.msra.mxu0 %v589
    %696 = vmatprep.subr.bf16.mxu0 0
    %697 = vmatpush1.bf16.msra.mxu0 %v590
    %698 = vmatprep.subr.bf16.mxu0 0
    %699 = vmatpush1.bf16.msra.mxu0 %v591
    %700 = vmatprep.subr.bf16.mxu0 0
    %701 = vmatpush1.bf16.msra.mxu0 %v592
    %702 = vmatprep.subr.bf16.mxu0 0
    %703 = vmatpush1.bf16.msra.mxu0 %v593
    %704 = vmatprep.subr.bf16.mxu0 0
    %705 = vmatpush1.bf16.msra.mxu0 %v594
    %706 = vmatprep.subr.bf16.mxu0 0
    %707 = vmatpush1.bf16.msra.mxu0 %v595
    %708 = vmatprep.mubr.bf16.mxu0 %v280
    %709 = vmatmul.mubr.bf16.gmra.mrb[0].mxu0 %v279
    %v710 = vpop.f32.mrb[0].mxu0
    %v711 = vadd.f32 %v386, %v710
    %v712 = vpop.f32.mrb[0].mxu0
    %v713 = vpop.f32.mrb[0].mxu0
    %v714 = vpop.f32.mrb[0].mxu0
    %715 = vdwg.mxu0
    %716 = vmatprep.subr.bf16.mxu0 0
    %717 = vmatpush1.bf16.msra.mxu0 %v596
    %718 = vmatprep.subr.bf16.mxu0 0
    %719 = vmatpush1.bf16.msra.mxu0 %v597
    %720 = vmatprep.subr.bf16.mxu0 0
    %721 = vmatpush1.bf16.msra.mxu0 %v598
    %722 = vmatprep.subr.bf16.mxu0 0
    %723 = vmatpush1.bf16.msra.mxu0 %v599
    %724 = vmatprep.subr.bf16.mxu0 0
    %725 = vmatpush1.bf16.msra.mxu0 %v600
    %726 = vmatprep.subr.bf16.mxu0 0
    %727 = vmatpush1.bf16.msra.mxu0 %v601
    %728 = vmatprep.subr.bf16.mxu0 0
    %729 = vmatpush1.bf16.msra.mxu0 %v602
    %730 = vmatprep.subr.bf16.mxu0 0
    %731 = vmatpush1.bf16.msra.mxu0 %v603
    %732 = vmatprep.subr.bf16.mxu0 0
    %733 = vmatpush1.bf16.msra.mxu0 %v604
    %734 = vmatprep.subr.bf16.mxu0 0
    %735 = vmatpush1.bf16.msra.mxu0 %v605
    %736 = vmatprep.subr.bf16.mxu0 0
    %737 = vmatpush1.bf16.msra.mxu0 %v606
    %738 = vmatprep.subr.bf16.mxu0 0
    %739 = vmatpush1.bf16.msra.mxu0 %v607
    %740 = vmatprep.subr.bf16.mxu0 0
    %741 = vmatpush1.bf16.msra.mxu0 %v608
    %742 = vmatprep.subr.bf16.mxu0 0
    %743 = vmatpush1.bf16.msra.mxu0 %v609
    %744 = vmatprep.subr.bf16.mxu0 0
    %745 = vmatpush1.bf16.msra.mxu0 %v610
    %746 = vmatprep.subr.bf16.mxu0 0
    %747 = vmatpush1.bf16.msra.mxu0 %v611
    %748 = vmatprep.mubr.bf16.mxu0 %v282
    %749 = vmatmul.mubr.bf16.gmra.mrb[0].mxu0 %v281
    %v750 = vpop.f32.mrb[0].mxu0
    %v751 = vadd.f32 %v711, %v750
    %v752 = vpop.f32.mrb[0].mxu0
    %v753 = vpop.f32.mrb[0].mxu0
    %v754 = vpop.f32.mrb[0].mxu0
    %755 = vdwg.mxu0
    %756 = vmatprep.subr.bf16.mxu0 0
    %757 = vmatpush1.bf16.msra.mxu0 %v612
    %758 = vmatprep.subr.bf16.mxu0 0
    %759 = vmatpush1.bf16.msra.mxu0 %v613
    %760 = vmatprep.subr.bf16.mxu0 0
    %761 = vmatpush1.bf16.msra.mxu0 %v614
    %762 = vmatprep.subr.bf16.mxu0 0
    %763 = vmatpush1.bf16.msra.mxu0 %v615
    %764 = vmatprep.subr.bf16.mxu0 0
    %765 = vmatpush1.bf16.msra.mxu0 %v616
    %766 = vmatprep.subr.bf16.mxu0 0
    %767 = vmatpush1.bf16.msra.mxu0 %v617
    %768 = vmatprep.subr.bf16.mxu0 0
    %769 = vmatpush1.bf16.msra.mxu0 %v618
    %770 = vmatprep.subr.bf16.mxu0 0
    %771 = vmatpush1.bf16.msra.mxu0 %v619
    %772 = vmatprep.subr.bf16.mxu0 0
    %773 = vmatpush1.bf16.msra.mxu0 %v620
    %774 = vmatprep.subr.bf16.mxu0 0
    %775 = vmatpush1.bf16.msra.mxu0 %v621
    %776 = vmatprep.subr.bf16.mxu0 0
    %777 = vmatpush1.bf16.msra.mxu0 %v622
    %778 = vmatprep.subr.bf16.mxu0 0
    %779 = vmatpush1.bf16.msra.mxu0 %v623
    %780 = vmatprep.subr.bf16.mxu0 0
    %781 = vmatpush1.bf16.msra.mxu0 %v624
    %782 = vmatprep.subr.bf16.mxu0 0
    %783 = vmatpush1.bf16.msra.mxu0 %v625
    %784 = vmatprep.subr.bf16.mxu0 0
    %785 = vmatpush1.bf16.msra.mxu0 %v626
    %786 = vmatprep.subr.bf16.mxu0 0
    %787 = vmatpush1.bf16.msra.mxu0 %v627
    %788 = vmatprep.mubr.bf16.mxu0 %v284
    %789 = vmatmul.mubr.bf16.gmra.mrb[0].mxu0 %v283
    %v790 = vpop.f32.mrb[0].mxu0
    %v791 = vadd.f32 %v751, %v790
    %v792 = vpop.f32.mrb[0].mxu0
    %v793 = vpop.f32.mrb[0].mxu0
    %v794 = vpop.f32.mrb[0].mxu0
    %795 = vdwg.mxu0
    %v796 = vtanh.pop %v791
    %v797 = vpack.c.bf16 %v796, %v796
    %v798 = vld [vmem:[%s5] sm:$0xff]
    %v799 = vld [vmem:[%s5 + $0x8] sm:$0xff]
    %v800 = vld [vmem:[%s5 + $0x10] sm:$0xff]
    %v801 = vld [vmem:[%s5 + $0x18] sm:$0xff]
    %v806 = vunpack.c.l.b16 %v798
    %v807 = vunpack.c.h.b16 %v798
    %v808 = vunpack.c.l.b16 %v799
    %v809 = vunpack.c.h.b16 %v799
    %v810 = vunpack.c.l.b16 %v800
    %v811 = vunpack.c.h.b16 %v800
    %v812 = vunpack.c.l.b16 %v801
    %v813 = vunpack.c.h.b16 %v801
    %v814 = vpack.c.b16 %v808, %v806
    %v815 = vpack.c.b16 %v809, %v807
    %v816 = vpack.c.b16 %v812, %v810
    %v817 = vpack.c.b16 %v813, %v811
    %vm822 = vcmask 261120
    %v824 = vsel %vm822, %v797, 0
    %826 = vmatprep.subr.bf16.mxu0 %v815
    %827 = vmatpush1.bf16.msra.mxu0 %v814
    %828 = vmatprep.subr.bf16.mxu0 %v817
    %829 = vmatpush1.bf16.msra.mxu0 %v816
    %830 = vmatprep.subr.bf16.mxu0 0
    %831 = vmatpush1.bf16.msra.mxu0 0
    %832 = vmatprep.subr.bf16.mxu0 0
    %833 = vmatpush1.bf16.msra.mxu0 0
    %834 = vmatprep.subr.bf16.mxu0 0
    %835 = vmatpush1.bf16.msra.mxu0 0
    %836 = vmatprep.subr.bf16.mxu0 0
    %837 = vmatpush1.bf16.msra.mxu0 0
    %838 = vmatprep.subr.bf16.mxu0 0
    %839 = vmatpush1.bf16.msra.mxu0 0
    %840 = vmatprep.subr.bf16.mxu0 0
    %841 = vmatpush1.bf16.msra.mxu0 0
    %842 = vmatprep.subr.bf16.mxu0 0
    %843 = vmatpush1.bf16.msra.mxu0 0
    %844 = vmatprep.subr.bf16.mxu0 0
    %845 = vmatpush1.bf16.msra.mxu0 0
    %846 = vmatprep.subr.bf16.mxu0 0
    %847 = vmatpush1.bf16.msra.mxu0 0
    %848 = vmatprep.subr.bf16.mxu0 0
    %849 = vmatpush1.bf16.msra.mxu0 0
    %850 = vmatprep.subr.bf16.mxu0 0
    %851 = vmatpush1.bf16.msra.mxu0 0
    %852 = vmatprep.subr.bf16.mxu0 0
    %853 = vmatpush1.bf16.msra.mxu0 0
    %854 = vmatprep.subr.bf16.mxu0 0
    %855 = vmatpush1.bf16.msra.mxu0 0
    %856 = vmatprep.subr.bf16.mxu0 0
    %857 = vmatpush1.bf16.msra.mxu0 0
    %858 = vmatprep.mubr.bf16.mxu0 0
    %859 = vmatmul.mubr.bf16.gmra.mrb[0].mxu0 %v824
    %v860 = vpop.f32.mrb[0].mxu0
    %v861 = vadd.f32 0.0, %v860
    %v862 = vpop.f32.mrb[0].mxu0
    %v863 = vadd.f32 0.0, %v862
    %v864 = vpop.f32.mrb[0].mxu0
    %v865 = vpop.f32.mrb[0].mxu0
    %866 = vdwg.mxu0
    %v867 = vld [vmem:[%s6] sm:$0xf]
    %v870 = vunpack.c.l.s4 1983009808
    %v871 = vunpack.c.0.s8 %v870
    %v872 = vlaneseq
    %v873 = vshrl.u32 %v872, 7
    %v874 = vsub.s32 %v871, %v873
    %v875 = vrot.slane %v867, %v874
    %v876 = vcombine.high %v875, %v875
    %v879 = vsub.f32 %v861, %v875
    %v880 = vsub.f32 %v863, %v876
    %v881 = vmul.f32 %v879, %v879
    %v882 = vmul.f32 %v880, %v880
    %vm883 = vcmask 1041408
    %v884 = vsel %vm883, %v881, 0.0
    %v885 = vsel %vm883, %v882, 0.0
    %v886 = vadd.f32 %v884, %v885
    %887 = vadd.xlane.f32.xlu0 %v886
    %v888 = vpop.xlane.xlu0 %887
    %v889 = vrot.slane %v888, 4
    %v890 = vadd.f32 %v888, %v889
    %v891 = vrot.slane %v890, 2
    %v892 = vadd.f32 %v890, %v891
    %v893 = vrot.slane %v892, 1
    %v894 = vadd.f32 %v892, %v893
    %s895 = vtos %v894
    %s896 = smul.f32 %s895, 0.001953125
    %s897 = scalar_lea.smem [#allocation2], 1
    %898 = sst [smem:[%s897]] %s896
    // Predicated region
    $region30: #{_forward_impl.1} parent=1 // pred_check
      _
    $region31: #{_forward_impl.1} parent=1 // pred_check_branch
      %900 = sbr.rel (0) target = $region33
    $region32: #{_forward_impl.1} parent=1 // pred_region
      %s902 = ssub.s32 16, 16
      %903 = vsyncadd [#allocation3], %s902
      %s905 = sshll.u32 %s7, 4
      %s906 = int_to_ptr.vmem [resolvable:$true] %s905
      %908 = dma.smem_to_vmem [#allocation2], 16, %s906, [#allocation3]
    $region33: #{_forward_impl.1} parent=1 // pred_fallthru
      _
    // Predicated region
    $region34: #{_forward_impl.1} parent=1 // pred_check
      _
    $region35: #{_forward_impl.1} parent=1 // pred_check_branch
      %910 = sbr.rel (0) target = $region37
    $region36: #{_forward_impl.1} parent=1 // pred_region
      %911 = dma.done [#allocation3], 16
    $region37: #{_forward_impl.1} parent=1 // pred_fallthru
      _
    %912 = sfence
    %913 = vsyncpa [#allocation3], 1

</llo_original>
